<compile_context>
chip_gen: v7x
topology: tpu7x:2x2x1
jax: 0.10.0
libtpu: 0.0.40
codegen_flags: <defaults>
</compile_context>

<pallas_src>
import jax
import jax.numpy as jnp
from jax.experimental import pallas as pl
from jax.experimental.pallas import tpu as pltpu

# ---------------- config (small but structurally faithful) ----------------
B = 2
SEQ_LEN = 48
PRED_LEN = 48                      # forward requires pred_len == seq_len
ENC_IN = 4
PERIOD = 24                        # hard-coded in the module
SEG_X = SEQ_LEN // PERIOD          # 2
SEG_Y = PRED_LEN // PERIOD         # 2
NUM_CLASS = 5
KSIZE = 1 + 2 * (PERIOD // 2)      # 25
PAD = PERIOD // 2                  # 12
FEAT = SEQ_LEN * ENC_IN            # 192


# ---------------- the single fused kernel ----------------
def _fused_kernel(x_ref, w_ref, bias_ref, o_ref):
    # x_ref:    (B, L*E)        flat feature index = t*ENC_IN + e (native layout)
    # w_ref:    (L*E, 2*NC)     [Rstack | Qstack] concatenated on the class axis
    # bias_ref: (1, NC)
    # o_ref:    (B, NC)
    x2 = x_ref[...]                                                   # (B, L*E)
    g = jnp.dot(x2, w_ref[...], preferred_element_type=jnp.float32)  # (B, 2*NC) — one MXU pass
    gr = g[:, :NUM_CLASS]                                             # centered (linear-chain) path
    gq = g[:, NUM_CLASS:]                                             # batch-mean re-add path
    # out = C@gr + A@gq  with C = I - A, A = (1/B)*11^T  ==>  gr + mean_batch(gq - gr)
    o_ref[...] = gr + jnp.mean(gq - gr, axis=0, keepdims=True) + bias_ref[...]


# ---------------- parameter-only preprocessing (host-side, done once) ----------------
def prepare_params(w_conv, w_lin, w_proj, b_proj):
    assert PRED_LEN == SEQ_LEN, "Model.forward requires pred_len == seq_len"

    # Toeplitz conv band (zero padding baked in) + identity (residual):
    #   z[t] = sum_s xc[s] * w_conv[s - t + PAD]  (0 <= s - t + PAD < KSIZE)  + xc[t]
    s = jnp.arange(SEQ_LEN)[:, None]
    t = jnp.arange(SEQ_LEN)[None, :]
    k = s - t + PAD
    band = jnp.where((k >= 0) & (k < KSIZE), w_conv[jnp.clip(k, 0, KSIZE - 1)], 0.0)
    cmat = band.astype(jnp.float32) + jnp.eye(SEQ_LEN, dtype=jnp.float32)      # (L, L)

    # Cross-period Linear(seg_x -> seg_y) as a (L, PRED) matrix:
    #   lmat[i*P + p, j*P + p] = w_lin[j, i]
    src = jnp.arange(SEQ_LEN)
    dst = jnp.arange(PRED_LEN)
    lmat = jnp.where((src[:, None] % PERIOD) == (dst[None, :] % PERIOD),
                     w_lin[dst[None, :] // PERIOD, src[:, None] // PERIOD],
                     0.0).astype(jnp.float32)                                   # (L, PRED)
    m_full = cmat @ lmat                                                        # (L, PRED)

    # Projection weight regrouped: p3[t', e, c] = w_proj[c, t'*E + e]
    p3 = w_proj.T.reshape(PRED_LEN, ENC_IN, NUM_CLASS).astype(jnp.float32)
    # Centered path folded through conv+residual+segment-linear:
    rstack = jnp.einsum('ts,sec->tec', m_full, p3).reshape(FEAT, NUM_CLASS)     # (L*E, NC)
    # Mean re-add path (projection applied straight to seq_mean):
    qstack = w_proj.T.astype(jnp.float32)                                       # (L*E, NC)

    wstack = jnp.concatenate([rstack, qstack], axis=1)                          # (L*E, 2*NC)
    bias = b_proj.reshape(1, NUM_CLASS).astype(jnp.float32)
    return wstack, bias


# ---------------- wrapper ----------------
@jax.jit
def sparse_tsf_forward(x, wstack, bias):
    bsz = x.shape[0]
    x2 = x.reshape(bsz, x.shape[1] * x.shape[2])   # no-copy reshape: flat index = t*ENC_IN + e
    vmem = pl.BlockSpec(memory_space=pltpu.MemorySpace.VMEM)   # whole-array blocks, no grid
    return pl.pallas_call(
        _fused_kernel,
        in_specs=[vmem, vmem, vmem],
        out_specs=vmem,
        out_shape=jax.ShapeDtypeStruct((bsz, NUM_CLASS), jnp.float32),
    )(x2, wstack, bias)


# ---------------- pure-JAX reference (mirrors the PyTorch forward) ----------------
def reference(x, w_conv, w_lin, w_proj, b_proj):
    bsz = x.shape[0]
    seq_mean = jnp.mean(x, axis=0, keepdims=True)                     # (1, L, E)
    xc = (x - seq_mean).transpose(0, 2, 1)                            # (B, E, L)
    xr = xc.reshape(-1, SEQ_LEN)
    xpad = jnp.pad(xr, ((0, 0), (PAD, PAD)))
    conv = sum(w_conv[k] * xpad[:, k:k + SEQ_LEN] for k in range(KSIZE))
    z = conv + xr
    zseg = z.reshape(-1, SEG_X, PERIOD).transpose(0, 2, 1)            # (B*E, P, SEG_X)
    y = zseg @ w_lin.T                                                # (B*E, P, SEG_Y)
    y = y.transpose(0, 2, 1).reshape(bsz, ENC_IN, PRED_LEN)
    y = y.transpose(0, 2, 1) + seq_mean                               # (B, PRED, E)
    y = y.reshape(bsz, -1)
    return y @ w_proj.T + b_proj


if __name__ == "__main__":
    key = jax.random.PRNGKey(0)
    k1, k2, k3, k4, k5 = jax.random.split(key, 5)

    # Deterministic synthetic parameters (shapes from Model.__init__)
    w_conv = jax.random.normal(k1, (KSIZE,), jnp.float32) * 0.1                 # Conv1d(1,1,25,bias=False)
    w_lin = jax.random.normal(k2, (SEG_Y, SEG_X), jnp.float32) * 0.5            # Linear(seg_x, seg_y, bias=False)
    w_proj = jax.random.normal(k3, (NUM_CLASS, ENC_IN * SEQ_LEN), jnp.float32) * 0.05
    b_proj = jax.random.normal(k4, (NUM_CLASS,), jnp.float32) * 0.01            # Linear(enc_in*seq_len, num_class)

    x = jax.random.normal(k5, (B, SEQ_LEN, ENC_IN), jnp.float32)
    # Unused-by-forward inputs (kept only to mirror the PyTorch signature):
    x_mark_enc = jnp.zeros((B, SEQ_LEN, 3), jnp.float32)
    x_dec = jnp.zeros((B, PRED_LEN, ENC_IN), jnp.float32)
    x_mark_dec = jnp.zeros((B, PRED_LEN, 3), jnp.float32)
    # TODO(synk): self.conv (Inception_Block_V1 stack) is built in __init__ but never used in forward(); not implemented.

    wstack, bias = prepare_params(w_conv, w_lin, w_proj, b_proj)
    out = jax.block_until_ready(sparse_tsf_forward(x, wstack, bias))

    ref = reference(x, w_conv, w_lin, w_proj, b_proj)
    assert out.shape == (B, NUM_CLASS), out.shape
    # Tolerance leaves headroom for the algebraic collapse (weights pre-multiplied
    # host-side, MXU f32 accumulation) vs. the stepwise reference; real bugs
    # produce O(0.1..1) errors.
    assert jnp.allclose(out, ref, rtol=1e-3, atol=1e-3), (out, ref)

    print("KERNEL_OK")
</pallas_src>

<mosaic_0001>
module attributes {stable_mosaic.version = 11 : i64} {
  func.func @_fused_kernel(%arg0: memref<2x192xf32, #tpu.memory_space<vmem>>, %arg1: memref<192x10xf32, #tpu.memory_space<vmem>>, %arg2: memref<1x5xf32, #tpu.memory_space<vmem>>, %arg3: memref<2x5xf32, #tpu.memory_space<vmem>>) attributes {dimension_semantics = [], scalar_prefetch = 0 : i64, scratch_operands = 0 : i64, tpu.core_type = #tpu.core_type<tc>} {
    %c0 = arith.constant 0 : index
    %c0_0 = arith.constant 0 : index
    %0 = vector.load %arg0[%c0, %c0_0] : memref<2x192xf32, #tpu.memory_space<vmem>>, vector<2x192xf32>
    %c0_1 = arith.constant 0 : index
    %c0_2 = arith.constant 0 : index
    %1 = vector.load %arg1[%c0_1, %c0_2] : memref<192x10xf32, #tpu.memory_space<vmem>>, vector<192x10xf32>
    %cst = arith.constant dense<0.000000e+00> : vector<2x10xf32>
    %2 = tpu.matmul %0, %1, %cst {dimension_numbers = #tpu.dot_dimension_numbers<[1], [0], [0], [1], [0, 0, 1, 1], [], []>} : vector<2x192xf32>, vector<192x10xf32>, vector<2x10xf32> -> vector<2x10xf32>
    %3 = vector.extract_strided_slice %2 {offsets = [0, 0], sizes = [2, 5], strides = [1, 1]} : vector<2x10xf32> to vector<2x5xf32>
    %4 = vector.extract_strided_slice %2 {offsets = [0, 5], sizes = [2, 5], strides = [1, 1]} : vector<2x10xf32> to vector<2x5xf32>
    %5 = arith.subf %4, %3 : vector<2x5xf32>
    %cst_3 = arith.constant dense<0.000000e+00> : vector<5xf32>
    %6 = vector.multi_reduction <add>, %5, %cst_3 [0] : vector<2x5xf32> to vector<5xf32>
    %7 = vector.shape_cast %6 : vector<5xf32> to vector<1x5xf32>
    %cst_4 = arith.constant 2.000000e+00 : f32
    %8 = vector.broadcast %cst_4 : f32 to vector<1x5xf32>
    %9 = arith.divf %7, %8 : vector<1x5xf32>
    %10 = vector.broadcast %9 : vector<1x5xf32> to vector<2x5xf32>
    %11 = arith.addf %3, %10 : vector<2x5xf32>
    %c0_5 = arith.constant 0 : index
    %c0_6 = arith.constant 0 : index
    %12 = vector.load %arg2[%c0_5, %c0_6] : memref<1x5xf32, #tpu.memory_space<vmem>>, vector<1x5xf32>
    %13 = vector.broadcast %12 : vector<1x5xf32> to vector<2x5xf32>
    %14 = arith.addf %11, %13 : vector<2x5xf32>
    %c0_7 = arith.constant 0 : index
    %c0_8 = arith.constant 0 : index
    %15 = vector.load %arg3[%c0_7, %c0_8] : memref<2x5xf32, #tpu.memory_space<vmem>>, vector<2x5xf32>
    tpu.vector_store %arg3[%c0_7, %c0_8], %14 {strides = array<i32>} : memref<2x5xf32, #tpu.memory_space<vmem>>, vector<2x5xf32>,
    return
  }
}

</mosaic_0001>

<llo_original>
// kernel: sparse_tsf_forward.1
$region0: #{sparse_tsf_forward.1}
  #allocation0 [shape = 'u32[]', space=smem, size = 0x4, offset = 0x4, fixed_abs, tag = 'smem constant byte address 0x4 - core index']
  #allocation1 [shape = 'u32[144,128]{1,0:T(1,128)}', space=vmem, size = 0x12000, scoped, tag = 'internal scratch']
  %s0 = inlined_call_operand.vmem [shape: f32[2,192], index: 0, kind: input, shape index: {}]
  %s1 = inlined_call_operand.vmem [shape: f32[192,10], index: 1, kind: input, shape index: {}]
  %s2 = inlined_call_operand.vmem [shape: f32[1,5], index: 2, kind: input, shape index: {}]
  %s3 = inlined_call_operand.hbm [shape: f32[2,5], index: 3, kind: output, shape index: {}]
  %s4 = sld [smem:[#allocation0]]
  $region22: #{sparse_tsf_forward.1} parent=0
    _
  %s6 = ssub.s32 1, %s4
  %s7 = scalar_select 0, %s6, %s4
  $region1: #{sparse_tsf_forward.1} parent=0
    #allocation2 [shape = 'u8[1024]{0}', space=vmem, size = 0x400, scoped, tag = 'output window, operand 0, single buffered']
    #allocation3 [shape = 's32[1]{0}', space=sflag, size = 0x4, scoped, tag = 'scoped memory for sparse_tsf_forward.1']
    %8 = vsyncpa [#allocation3], 0
    // Predicated region
    $region2: #{sparse_tsf_forward.1} parent=1 // pred_check
      _
    $region3: #{sparse_tsf_forward.1} parent=1 // pred_check_branch
      %10 = sbr.rel (0) target = $region5
    $region4: #{sparse_tsf_forward.1} parent=1 // pred_region
      _
    $region5: #{sparse_tsf_forward.1} parent=1 // pred_fallthru
      _
    // Predicated region
    $region6: #{sparse_tsf_forward.1} parent=1 // pred_check
      _
    $region7: #{sparse_tsf_forward.1} parent=1 // pred_check_branch
      %12 = sbr.rel (0) target = $region9
    $region8: #{sparse_tsf_forward.1} parent=1 // pred_region
      _
    $region9: #{sparse_tsf_forward.1} parent=1 // pred_fallthru
      _
    // Predicated region
    $region10: #{sparse_tsf_forward.1} parent=1 // pred_check
      _
    $region11: #{sparse_tsf_forward.1} parent=1 // pred_check_branch
      %14 = sbr.rel (0) target = $region13
    $region12: #{sparse_tsf_forward.1} parent=1 // pred_region
      _
    $region13: #{sparse_tsf_forward.1} parent=1 // pred_fallthru
      _
    %v15 = vld [vmem:[%s0] sm:$0xf]
    %v16 = vld [vmem:[%s1] sm:$0xff]
    %v17 = vld [vmem:[%s1 + $0x8] sm:$0xff]
    %v18 = vld [vmem:[%s1 + $0x10] sm:$0xff]
    %v19 = vld [vmem:[%s1 + $0x18] sm:$0xff]
    %v20 = vld [vmem:[%s1 + $0x20] sm:$0xff]
    %v21 = vld [vmem:[%s1 + $0x28] sm:$0xff]
    %v22 = vld [vmem:[%s1 + $0x30] sm:$0xff]
    %v23 = vld [vmem:[%s1 + $0x38] sm:$0xff]
    %v24 = vld [vmem:[%s1 + $0x40] sm:$0xff]
    %v25 = vld [vmem:[%s1 + $0x48] sm:$0xff]
    %v26 = vld [vmem:[%s1 + $0x50] sm:$0xff]
    %v27 = vld [vmem:[%s1 + $0x58] sm:$0xff]
    %v28 = vld [vmem:[%s1 + $0x60] sm:$0xff]
    %v29 = vld [vmem:[%s1 + $0x68] sm:$0xff]
    %v30 = vld [vmem:[%s1 + $0x70] sm:$0xff]
    %v31 = vld [vmem:[%s1 + $0x78] sm:$0xff]
    %v32 = vld [vmem:[%s1 + $0x80] sm:$0xff]
    %v33 = vld [vmem:[%s1 + $0x88] sm:$0xff]
    %v34 = vld [vmem:[%s1 + $0x90] sm:$0xff]
    %v35 = vld [vmem:[%s1 + $0x98] sm:$0xff]
    %v36 = vld [vmem:[%s1 + $0xa0] sm:$0xff]
    %v37 = vld [vmem:[%s1 + $0xa8] sm:$0xff]
    %v38 = vld [vmem:[%s1 + $0xb0] sm:$0xff]
    %v39 = vld [vmem:[%s1 + $0xb8] sm:$0xff]
    %v42 = vunpack.c.l.s4 1983009808
    %v43 = vunpack.c.0.s8 %v42
    %v44 = vlaneseq
    %v45 = vshrl.u32 %v44, 7
    %v46 = vsub.s32 %v43, %v45
    %v47 = vrot.slane %v15, %v46
    %v48 = vcombine.high %v47, %v47
    %vm50 = vcmask 523264
    %v51 = vsel %vm50, %v48, 0
    %53 = vmatprep.subr.mxu0 0.0
    %54 = vmatpush1.msra.mxu0 %v16
    %55 = vmatprep.subr.mxu0 0.0
    %56 = vmatpush1.msra.mxu0 %v17
    %57 = vmatprep.subr.mxu0 0.0
    %58 = vmatpush1.msra.mxu0 %v18
    %59 = vmatprep.subr.mxu0 0.0
    %60 = vmatpush1.msra.mxu0 %v19
    %61 = vmatprep.subr.mxu0 0.0
    %62 = vmatpush1.msra.mxu0 %v20
    %63 = vmatprep.subr.mxu0 0.0
    %64 = vmatpush1.msra.mxu0 %v21
    %65 = vmatprep.subr.mxu0 0.0
    %66 = vmatpush1.msra.mxu0 %v22
    %67 = vmatprep.subr.mxu0 0.0
    %68 = vmatpush1.msra.mxu0 %v23
    %69 = vmatprep.subr.mxu0 0.0
    %70 = vmatpush1.msra.mxu0 %v24
    %71 = vmatprep.subr.mxu0 0.0
    %72 = vmatpush1.msra.mxu0 %v25
    %73 = vmatprep.subr.mxu0 0.0
    %74 = vmatpush1.msra.mxu0 %v26
    %75 = vmatprep.subr.mxu0 0.0
    %76 = vmatpush1.msra.mxu0 %v27
    %77 = vmatprep.subr.mxu0 0.0
    %78 = vmatpush1.msra.mxu0 %v28
    %79 = vmatprep.subr.mxu0 0.0
    %80 = vmatpush1.msra.mxu0 %v29
    %81 = vmatprep.subr.mxu0 0.0
    %82 = vmatpush1.msra.mxu0 %v30
    %83 = vmatprep.subr.mxu0 0.0
    %84 = vmatpush1.msra.mxu0 %v31
    %85 = vmatprep.subr.mxu0 0.0
    %86 = vmatpush1.msra.mxu0 %v32
    %87 = vmatprep.subr.mxu0 0.0
    %88 = vmatpush1.msra.mxu0 %v33
    %89 = vmatprep.subr.mxu0 0.0
    %90 = vmatpush1.msra.mxu0 %v34
    %91 = vmatprep.subr.mxu0 0.0
    %92 = vmatpush1.msra.mxu0 %v35
    %93 = vmatprep.subr.mxu0 0.0
    %94 = vmatpush1.msra.mxu0 %v36
    %95 = vmatprep.subr.mxu0 0.0
    %96 = vmatpush1.msra.mxu0 %v37
    %97 = vmatprep.subr.mxu0 0.0
    %98 = vmatpush1.msra.mxu0 %v38
    %99 = vmatprep.subr.mxu0 0.0
    %100 = vmatpush1.msra.mxu0 %v39
    %101 = vmatprep.subr.mxu0 0.0
    %102 = vmatpush1.msra.mxu0 0.0
    %103 = vmatprep.subr.mxu0 0.0
    %104 = vmatpush1.msra.mxu0 0.0
    %105 = vmatprep.subr.mxu0 0.0
    %106 = vmatpush1.msra.mxu0 0.0
    %107 = vmatprep.subr.mxu0 0.0
    %108 = vmatpush1.msra.mxu0 0.0
    %109 = vmatprep.subr.mxu0 0.0
    %110 = vmatpush1.msra.mxu0 0.0
    %111 = vmatprep.subr.mxu0 0.0
    %112 = vmatpush1.msra.mxu0 0.0
    %113 = vmatprep.subr.mxu0 0.0
    %114 = vmatpush1.msra.mxu0 0.0
    %115 = vmatprep.subr.mxu0 0.0
    %116 = vmatpush1.msra.mxu0 0.0
    %117 = vmatprep.mubr.f32.mxu0 %v51
    %118 = vmatmul.mubr.f32.gmra.mrb[0].mxu0 %v47
    %v119 = vpop.f32.mrb[0].mxu0
    %v120 = vadd.f32 0.0, %v119
    %v121 = vpop.f32.mrb[0].mxu0
    %122 = vdwg.mxu0
    %124 = vrot.lane.b32.xlu0 %v120, 5
    %v125 = vpop.permute.xlu0 %124
    %v127 = vsub.f32 %v120, %v125
    %vm128 = vcmask 74792
    %v129 = vsel %vm128, %v127, 0.0
    %v130 = vrot.slane %v129, 4
    %v131 = vadd.f32 %v129, %v130
    %v132 = vrot.slane %v131, 2
    %v133 = vadd.f32 %v131, %v132
    %v134 = vrot.slane %v133, 1
    %v135 = vadd.f32 %v133, %v134
    %v136 = vrcp.pop 2.0
    %v137 = vmul.f32 %v135, %v136
    %139 = vrot.lane.b32.xlu0 %v137, 123
    %v140 = vpop.permute.xlu0 %139
    %v142 = vadd.f32 %v120, %v140
    %v143 = vld [vmem:[%s2] sm:$0x1]
    %v145 = vlaneseq
    %v146 = vshrl.u32 %v145, 7
    %v147 = vsub.s32 0, %v146
    %v148 = vrot.slane %v143, %v147
    %v150 = vadd.f32 %v142, %v148
    %vm151 = vcmask 33792
    %152 = vst.msk [vmem:[#allocation2] sm:$0x3] %vm151, %v150
    // Predicated region
    $region14: #{sparse_tsf_forward.1} parent=1 // pred_check
      _
    $region15: #{sparse_tsf_forward.1} parent=1 // pred_check_branch
      %154 = sbr.rel (0) target = $region17
    $region16: #{sparse_tsf_forward.1} parent=1 // pred_region
      %s156 = ssub.s32 32, 32
      %157 = vsyncadd [#allocation3], %s156
      %s159 = sshll.u32 [#allocation2], 4
      %s160 = int_to_ptr.vmem [resolvable:$true] %s159
      %162 = dma.vmem_to_hbm [thread:$0]  %s160, 32, %s3, [#allocation3]
    $region17: #{sparse_tsf_forward.1} parent=1 // pred_fallthru
      _
    // Predicated region
    $region18: #{sparse_tsf_forward.1} parent=1 // pred_check
      _
    $region19: #{sparse_tsf_forward.1} parent=1 // pred_check_branch
      %164 = sbr.rel (0) target = $region21
    $region20: #{sparse_tsf_forward.1} parent=1 // pred_region
      %165 = dma.done [#allocation3], 32
    $region21: #{sparse_tsf_forward.1} parent=1 // pred_fallthru
      _
    %166 = vsyncpa [#allocation3], 1

</llo_original>
